<compile_context>
chip_gen: v7x
topology: tpu7x:2x2x1
jax: 0.10.0
libtpu: 0.0.40
codegen_flags: <defaults>
</compile_context>

<pallas_src>
import functools

import jax
import jax.numpy as jnp
import numpy as np
from jax.experimental import pallas as pl
from jax.experimental.pallas import tpu as pltpu


def _length_regulator_kernel(mel_len_ref, xT_ref, cums_ref, outT_ref, *, precision):
    # mel_len_ref: (B,)       int32, SMEM (scalar prefetch: per-batch total frames)
    # xT_ref:      (1, H, T)  x.dtype, VMEM (this batch's phonemes, transposed)
    # cums_ref:    (1, T, 2)  int32, VMEM ([:, :, 0]=inclusive cumsum, [:, :, 1]=exclusive)
    # outT_ref:    (1, H, TF) x.dtype, VMEM (one lane-dense frame tile, transposed)
    b = pl.program_id(0)
    f = pl.program_id(1)
    tf = outT_ref.shape[2]
    t = xT_ref.shape[2]
    tile_start = f * tf

    total = mel_len_ref[b]

    @pl.when(tile_start < total)
    def _compute_tile():
        # shift both cumsums by the tile start: a (T, 2) scalar-broadcast subtract
        cums = cums_ref[0] - tile_start          # (T, 2) int32
        cum_s = cums[:, 0:1]                     # (T, 1) inclusive
        cum_prev_s = cums[:, 1:2]                # (T, 1) exclusive
        # frame (tile_start + j) picks phoneme i iff cum_prev[i] <= tile_start+j < cum[i]
        j = jax.lax.broadcasted_iota(jnp.int32, (t, tf), 1)
        # one-hot selection matrix (transposed): one AND + one cast, entries are 0/1
        maskT = ((j >= cum_prev_s) & (j < cum_s)).astype(xT_ref.dtype)   # (T, TF)
        outT = jnp.dot(
            xT_ref[0], maskT,
            preferred_element_type=jnp.float32,
            precision=precision,
        )                                                                # (H, TF)
        outT_ref[0] = outT.astype(outT_ref.dtype)

    @pl.when(tile_start >= total)
    def _zero_tile():
        # this frame tile is entirely padding: skip mask + matmul work
        outT_ref[...] = jnp.zeros(outT_ref.shape, dtype=outT_ref.dtype)


def _choose_frame_tile(max_len, requested=None, cap=1024):
    """Pick the lane-dim frame tile of the (B, H, max_len) kernel output."""
    if requested is not None:
        return min(int(requested), max_len)
    if max_len <= cap:
        return max_len                 # single full-dim tile (always a legal block)
    # multiple of 256 fills the v6e/v7x MXU N-dim and is also a multiple of
    # 128 (lane width / v5e MXU); the last grid tile may be partial.
    return (cap // 256) * 256


def _vmem_limit_bytes(T, H, tf, dtype):
    """Per-step VMEM footprint with headroom; None if the default limit suffices."""
    item = np.dtype(dtype).itemsize
    per_step = (
        2 * H * T * item        # x^T tile, double-buffered
        + 2 * T * 2 * 4         # fused (cum, cum_prev) rows, double-buffered
        + 2 * H * tf * item     # output tile, double-buffered
        + T * tf * (4 + item)   # iota/compare + mask intermediates
        + H * tf * 4            # f32 matmul accumulator
    )
    limit = 4 * per_step        # headroom for compiler temporaries
    default = 32 * 1024 * 1024
    if limit <= default:
        return None
    # stay inside v7x's 64 MiB physical VMEM (2 TCs per chip)
    return int(min(limit, 48 * 1024 * 1024))


def length_regulator(x, duration, max_len, *, frame_tile=None):
    """x: (B, T, H); duration: (B, T) int; max_len: python int.

    Returns (output (B, max_len, H) x.dtype, mel_len (B,) int32).
    """
    B, T, H = x.shape

    # hoisted scalar work: clamp, cumsum, total length (one fused XLA reduce)
    dur = jnp.maximum(duration.astype(jnp.int32), 0)
    cum = jnp.cumsum(dur, axis=1)                    # (B, T) inclusive
    cum_prev = cum - dur                             # (B, T) exclusive
    mel_len = cum[:, -1]                             # (B,) int32

    tf = _choose_frame_tile(max_len, frame_tile)
    num_tiles = pl.cdiv(max_len, tf)

    # layout plumbing (outside the kernel):
    #   * x transposed so the kernel's matmul output is (H, TF) with TF on lanes
    #   * cum / cum_prev fused into one (B, T, 2) operand
    xT = jnp.swapaxes(x, 1, 2)                       # (B, H, T)
    cums = jnp.stack([cum, cum_prev], axis=-1)       # (B, T, 2) int32

    # exact gather even for float32 models (default precision may drop to bf16 passes)
    precision = (jax.lax.Precision.HIGHEST
                 if x.dtype == jnp.float32 else jax.lax.Precision.DEFAULT)
    kernel = functools.partial(_length_regulator_kernel, precision=precision)

    outT = pl.pallas_call(
        kernel,
        out_shape=jax.ShapeDtypeStruct((B, H, max_len), x.dtype),
        grid_spec=pltpu.PrefetchScalarGridSpec(
            num_scalar_prefetch=1,                   # mel_len -> SMEM
            grid=(B, num_tiles),
            in_specs=[
                pl.BlockSpec((1, H, T), lambda b, f, mel: (b, 0, 0)),   # x^T row
                pl.BlockSpec((1, T, 2), lambda b, f, mel: (b, 0, 0)),   # fused cumsums
            ],
            out_specs=pl.BlockSpec((1, H, tf), lambda b, f, mel: (b, 0, f)),
        ),
        compiler_params=pltpu.CompilerParams(
            # batch and frame-tile steps are independent -> megacore-shardable
            dimension_semantics=("parallel", "parallel"),
            vmem_limit_bytes=_vmem_limit_bytes(T, H, tf, x.dtype),
        ),
    )(mel_len, xT, cums)

    out = jnp.swapaxes(outT, 1, 2)                   # (B, max_len, H)
    return out, mel_len


def _reference(x, duration, max_len):
    x = np.asarray(x)
    duration = np.clip(np.asarray(duration), 0, None)
    B, T, H = x.shape
    out = np.zeros((B, max_len, H), dtype=x.dtype)
    mel_len = np.zeros((B,), dtype=np.int32)
    for b in range(B):
        expanded = np.repeat(x[b], duration[b], axis=0)
        mel_len[b] = expanded.shape[0]
        n = min(expanded.shape[0], max_len)
        out[b, :n] = expanded[:n]
    return out, mel_len


if __name__ == "__main__":
    B, T, H = 2, 8, 32
    MAX_LEN = 256            # frame_tile=128 -> 2 lane-dense tiles/batch; 2nd is all padding

    key = jax.random.PRNGKey(0)
    kx, kd = jax.random.split(key)
    x = jax.random.normal(kx, (B, T, H), dtype=jnp.float32)
    duration = jax.random.randint(kd, (B, T), 0, 8, dtype=jnp.int32)  # sums <= 56 << MAX_LEN

    out, mel_len = length_regulator(x, duration, MAX_LEN, frame_tile=128)
    out = jax.block_until_ready(out)
    mel_len = jax.block_until_ready(mel_len)

    ref_out, ref_len = _reference(x, duration, MAX_LEN)
    assert out.shape == (B, MAX_LEN, H)
    assert mel_len.shape == (B,)
    np.testing.assert_allclose(np.asarray(out), ref_out, atol=1e-5, rtol=1e-5)
    np.testing.assert_array_equal(np.asarray(mel_len), ref_len)

    print("KERNEL_OK")
</pallas_src>

<mosaic_0001>
module attributes {stable_mosaic.version = 11 : i64} {
  func.func @_length_regulator_kernel(%arg0: i32, %arg1: i32, %arg2: memref<2xi32, #tpu.memory_space<smem>>, %arg3: memref<1x32x8xf32, #tpu.memory_space<vmem>>, %arg4: memref<1x8x2xi32, #tpu.memory_space<vmem>>, %arg5: memref<1x32x128xf32, #tpu.memory_space<vmem>>) attributes {dimension_semantics = [#tpu.dimension_semantics<parallel>, #tpu.dimension_semantics<parallel>], iteration_bounds = array<i64: 2, 2>, scalar_prefetch = 1 : i64, scratch_operands = 0 : i64, tpu.core_type = #tpu.core_type<tc>, window_params = [{transform_indices = @transform_0, window_bounds = array<i64: 1, 32, 8>}, {transform_indices = @transform_1, window_bounds = array<i64: 1, 8, 2>}, {transform_indices = @transform_2, window_bounds = array<i64: 1, 32, 128>}]} {
    %c128_i32 = arith.constant 128 : i32
    %0 = arith.muli %arg1, %c128_i32 : i32
    %1 = arith.index_cast %arg0 : i32 to index
    %2 = memref.load %arg2[%1] : memref<2xi32, #tpu.memory_space<smem>>
    %3 = arith.cmpi slt, %0, %2 : i32
    %4 = arith.extui %3 : i1 to i32
    %c0_i32 = arith.constant 0 : i32
    %5 = arith.cmpi ne, %4, %c0_i32 : i32
    scf.if %5 {
      %c0 = arith.constant 0 : index
      %c0_1 = arith.constant 0 : index
      %c0_2 = arith.constant 0 : index
      %9 = vector.load %arg4[%c0, %c0_1, %c0_2] : memref<1x8x2xi32, #tpu.memory_space<vmem>>, vector<1x8x2xi32>
      %10 = vector.shape_cast %9 : vector<1x8x2xi32> to vector<8x2xi32>
      %11 = vector.broadcast %0 : i32 to vector<8x2xi32>
      %12 = arith.subi %10, %11 : vector<8x2xi32>
      %13 = vector.extract_strided_slice %12 {offsets = [0, 0], sizes = [8, 1], strides = [1, 1]} : vector<8x2xi32> to vector<8x1xi32>
      %14 = vector.extract_strided_slice %12 {offsets = [0, 1], sizes = [8, 1], strides = [1, 1]} : vector<8x2xi32> to vector<8x1xi32>
      %15 = tpu.iota {dimensions = array<i32: 1>} : vector<8x128xi32>
      %16 = vector.broadcast %14 : vector<8x1xi32> to vector<8x128xi32>
      %17 = arith.cmpi sge, %15, %16 : vector<8x128xi32>
      %18 = vector.broadcast %13 : vector<8x1xi32> to vector<8x128xi32>
      %19 = arith.cmpi slt, %15, %18 : vector<8x128xi32>
      %20 = arith.andi %17, %19 : vector<8x128xi1>
      %21 = arith.extui %20 : vector<8x128xi1> to vector<8x128xi32>
      %22 = arith.sitofp %21 : vector<8x128xi32> to vector<8x128xf32>
      %c0_3 = arith.constant 0 : index
      %c0_4 = arith.constant 0 : index
      %c0_5 = arith.constant 0 : index
      %23 = vector.load %arg3[%c0_3, %c0_4, %c0_5] : memref<1x32x8xf32, #tpu.memory_space<vmem>>, vector<1x32x8xf32>
      %24 = vector.shape_cast %23 : vector<1x32x8xf32> to vector<32x8xf32>
      %cst = arith.constant dense<0.000000e+00> : vector<32x128xf32>
      %25 = tpu.matmul %24, %22, %cst {dimension_numbers = #tpu.dot_dimension_numbers<[1], [0], [0], [1], [0, 0, 1, 1], [], []>, precision = #tpu.contract_precision<fp32>} : vector<32x8xf32>, vector<8x128xf32>, vector<32x128xf32> -> vector<32x128xf32>
      %c0_6 = arith.constant 0 : index
      %c0_7 = arith.constant 0 : index
      %c0_8 = arith.constant 0 : index
      %26 = vector.load %arg5[%c0_6, %c0_7, %c0_8] : memref<1x32x128xf32, #tpu.memory_space<vmem>>, vector<1x32x128xf32>
      %27 = vector.shape_cast %26 : vector<1x32x128xf32> to vector<32x128xf32>
      %28 = vector.shape_cast %25 : vector<32x128xf32> to vector<1x32x128xf32>
      tpu.vector_store %arg5[%c0_6, %c0_7, %c0_8], %28 {strides = array<i32>} : memref<1x32x128xf32, #tpu.memory_space<vmem>>, vector<1x32x128xf32>,
    } else {
    }
    %6 = arith.cmpi sge, %0, %2 : i32
    %7 = arith.extui %6 : i1 to i32
    %c0_i32_0 = arith.constant 0 : i32
    %8 = arith.cmpi ne, %7, %c0_i32_0 : i32
    scf.if %8 {
      %cst = arith.constant 0.000000e+00 : f32
      %9 = vector.broadcast %cst : f32 to vector<1x32x128xf32>
      %c0 = arith.constant 0 : index
      %c0_1 = arith.constant 0 : index
      %c0_2 = arith.constant 0 : index
      %10 = vector.load %arg5[%c0, %c0_1, %c0_2] : memref<1x32x128xf32, #tpu.memory_space<vmem>>, vector<1x32x128xf32>
      tpu.vector_store %arg5[%c0, %c0_1, %c0_2], %9 {strides = array<i32>} : memref<1x32x128xf32, #tpu.memory_space<vmem>>, vector<1x32x128xf32>,
    } else {
    }
    return
  }
  func.func @transform_0(%arg0: i32, %arg1: i32, %arg2: memref<2xi32, #tpu.memory_space<smem>>) -> (i32, i32, i32) {
    %c0_i32 = arith.constant 0 : i32
    %c0_i32_0 = arith.constant 0 : i32
    %c0_i32_1 = arith.constant 0 : i32
    return %arg0, %c0_i32, %c0_i32_0 : i32, i32, i32
  }
  func.func @transform_1(%arg0: i32, %arg1: i32, %arg2: memref<2xi32, #tpu.memory_space<smem>>) -> (i32, i32, i32) {
    %c0_i32 = arith.constant 0 : i32
    %c0_i32_0 = arith.constant 0 : i32
    %c0_i32_1 = arith.constant 0 : i32
    return %arg0, %c0_i32, %c0_i32_0 : i32, i32, i32
  }
  func.func @transform_2(%arg0: i32, %arg1: i32, %arg2: memref<2xi32, #tpu.memory_space<smem>>) -> (i32, i32, i32) {
    %c0_i32 = arith.constant 0 : i32
    %c0_i32_0 = arith.constant 0 : i32
    return %arg0, %c0_i32, %arg1 : i32, i32, i32
  }
}

</mosaic_0001>

<llo_original>
// kernel: tpu_custom_call.1
$region0: #{tpu_custom_call.1}
  #allocation0 [shape = 'u32[]', space=smem, size = 0x4, offset = 0x4, fixed_abs, tag = 'smem constant byte address 0x4 - core index']
  #allocation1 [shape = 'u32[144,128]{1,0:T(1,128)}', space=vmem, size = 0x12000, scoped, tag = 'internal scratch']
  #allocation2 [shape = 's32[1]{0}', space=sflag, size = 0x4, scoped, tag = 'scoped memory for tpu_custom_call.1']
  #allocation3 [shape = 'u8[512]{0}', space=smem, size = 0x200, scoped, tag = 'prefetched SMEM operand 0']
  %s0 = inlined_call_operand.vmem [shape: s32[2], index: 0, kind: input, shape index: {}]
  %s1 = inlined_call_operand.vmem [shape: f32[2,32,8], index: 1, kind: input, shape index: {}]
  %s2 = inlined_call_operand.vmem [shape: s32[2,8,2], index: 2, kind: input, shape index: {}]
  %s3 = inlined_call_operand.hbm [shape: f32[2,32,256], index: 3, kind: output, shape index: {}]
  %s4 = sld [smem:[#allocation0]]
  $region49: #{tpu_custom_call.1} parent=0
    _
  %s6 = ssub.s32 1, %s4
  %s7 = scalar_select 0, %s6, %s4
  %s8 = sshll.u32 %s0, 4
  %s9 = int_to_ptr.vmem [resolvable:$true] %s8
  %11 = dma.vmem_to_smem %s9, 16, [#allocation3], [#allocation2]
  %12 = dma.done [#allocation2], 16
  %13 = sfence
  $region1: #{tpu_custom_call.1} parent=0
    #allocation4 [shape = 'u8[32768]{0}', space=vmem, size = 0x8000, scoped, tag = 'output window, operand 0']
    #allocation5 [shape = 's32[2]{0}', space=sflag, size = 0x8, scoped, tag = 'scoped memory for tpu_custom_call.1']
    %14 = vsyncpa [#allocation5], 0
    %s15 = scalar_lea.sflag [#allocation5], 1
    %16 = vsyncpa %s15, 0
    loop: start=0, step=1, limit=6
    $region2: #{tpu_custom_call.1} parent=1 // loop_pre_header
      _
    $region3: #{tpu_custom_call.1} parent=1 // loop_header
      %s18 = sphi 0, %s22
      %p19 = scmp.ge.s32.totalorder %s18, 6
      %s25 = sphi 0, %s37
      %s26 = sphi 0, %s33
      %s27 = sphi 0, %s25
      %s28 = sphi 0, %s26
      %s29 = sphi 0, %s27
      %s30 = sphi 0, %s28
      %s40 = sphi 0, %s42
      %s43 = sphi 0, %s40
      %s44 = sphi 0, %s43
      %s60 = sphi 0, %s44
      %s66 = sphi 0, %s68
      %s69 = sphi 0, %s66
      %s70 = sphi 0, %s69
      %s86 = sphi 0, %s70
      %s94 = sphi 0, %s96
      %s97 = sphi 0, %s94
      %s98 = sphi 0, %s97
      %s114 = sphi 0, %s98
    $region4: #{tpu_custom_call.1} parent=1 // loop_header_branch
      %21 = sbr.rel (%p19) target = $region8
    $region5: #{tpu_custom_call.1} parent=1 // loop_body
      %s23 = ssub.s32 %s18, 1
      %s24 = ssub.s32 %s18, 2
      %s31 = sadd.s32 1, %s26
      %p32 = scmp.ge.s32.totalorder %s31, 2
      %s33 = scalar_select %p32, 0, %s31
      %s34 = sadd.s32 1, %s25
      %s35 = scalar_select %p32, %s34, %s25
      %p36 = scmp.ge.s32.totalorder %s35, 2
      %s37 = scalar_select %p36, 0, %s35
      %s38 = ssub.s32 %s25, %s37
      %p39 = scmp.eq.s32.totalorder %s38, 0
      %s41 = sadd.s32 %s40, 1
      %s42 = scalar_select %p39, %s40, %s41
      %p45 = pneg %p39
      %p46 = scmp.eq.s32.totalorder %s18, 3
      %p47 = por %p45, %p46
      %p48 = scmp.ne.s32.totalorder %s40, %s43
      %p49 = scmp.eq.s32.totalorder %s18, 0
      %p50 = por %p48, %p49
      %p51 = scmp.ne.s32.totalorder %s40, %s43
      %p52 = scmp.eq.s32.totalorder %s23, 3
      %p53 = por %p51, %p52
      %p54 = scmp.ne.s32.totalorder %s43, %s44
      %p55 = scmp.eq.s32.totalorder %s23, 0
      %p56 = por %p54, %p55
      %p57 = scmp.ne.s32.totalorder %s43, %s44
      %p58 = scmp.eq.s32.totalorder %s24, 3
      %p59 = por %p57, %p58
      %p61 = scmp.ne.s32.totalorder %s44, %s60
      %p62 = scmp.eq.s32.totalorder %s24, 0
      %p63 = por %p61, %p62
      %s64 = ssub.s32 %s25, %s37
      %p65 = scmp.eq.s32.totalorder %s64, 0
      %s67 = sadd.s32 %s66, 1
      %s68 = scalar_select %p65, %s66, %s67
      %p71 = pneg %p65
      %p72 = scmp.eq.s32.totalorder %s18, 3
      %p73 = por %p71, %p72
      %p74 = scmp.ne.s32.totalorder %s66, %s69
      %p75 = scmp.eq.s32.totalorder %s18, 0
      %p76 = por %p74, %p75
      %p77 = scmp.ne.s32.totalorder %s66, %s69
      %p78 = scmp.eq.s32.totalorder %s23, 3
      %p79 = por %p77, %p78
      %p80 = scmp.ne.s32.totalorder %s69, %s70
      %p81 = scmp.eq.s32.totalorder %s23, 0
      %p82 = por %p80, %p81
      %p83 = scmp.ne.s32.totalorder %s69, %s70
      %p84 = scmp.eq.s32.totalorder %s24, 3
      %p85 = por %p83, %p84
      %p87 = scmp.ne.s32.totalorder %s70, %s86
      %p88 = scmp.eq.s32.totalorder %s24, 0
      %p89 = por %p87, %p88
      %s90 = ssub.s32 %s25, %s37
      %s91 = ssub.s32 %s26, %s33
      %s92 = sor.u32 %s90, %s91
      %p93 = scmp.eq.s32.totalorder %s92, 0
      %s95 = sadd.s32 %s94, 1
      %s96 = scalar_select %p93, %s94, %s95
      %p99 = pneg %p93
      %p100 = scmp.eq.s32.totalorder %s18, 3
      %p101 = por %p99, %p100
      %p102 = scmp.ne.s32.totalorder %s94, %s97
      %p103 = scmp.eq.s32.totalorder %s18, 0
      %p104 = por %p102, %p103
      %p105 = scmp.ne.s32.totalorder %s94, %s97
      %p106 = scmp.eq.s32.totalorder %s23, 3
      %p107 = por %p105, %p106
      %p108 = scmp.ne.s32.totalorder %s97, %s98
      %p109 = scmp.eq.s32.totalorder %s23, 0
      %p110 = por %p108, %p109
      %p111 = scmp.ne.s32.totalorder %s97, %s98
      %p112 = scmp.eq.s32.totalorder %s24, 3
      %p113 = por %p111, %p112
      %p115 = scmp.ne.s32.totalorder %s98, %s114
      %p116 = scmp.eq.s32.totalorder %s24, 0
      %p117 = por %p115, %p116
      %p118 = scmp.le.s32.totalorder 1, %s18
      %p119 = scmp.lt.s32.totalorder %s18, 5
      %p120 = pnand %p118, %p119
      %p121 = pneg %p120
      // Predicated region
      $region9: #{tpu_custom_call.1} parent=5 // pred_check
        _
      $region10: #{tpu_custom_call.1} parent=5 // pred_check_branch
        %123 = sbr.rel (%p120) target = $region12
      $region11: #{tpu_custom_call.1} parent=5 // pred_region
        %s124 = ssub.s32 %s18, 1
      $region12: #{tpu_custom_call.1} parent=5 // pred_fallthru
        _
      %p125 = scmp.lt.s32.totalorder %s18, 4
      // Predicated region
      $region13: #{tpu_custom_call.1} parent=5 // pred_check
        %p126 = pneg %p125
      $region14: #{tpu_custom_call.1} parent=5 // pred_check_branch
        %128 = sbr.rel (%p126) target = $region16
      $region15: #{tpu_custom_call.1} parent=5 // pred_region
        // Predicated region
        $region17: #{tpu_custom_call.1} parent=15 // pred_check
          %p129 = pneg %p50
        $region18: #{tpu_custom_call.1} parent=15 // pred_check_branch
          %131 = sbr.rel (%p129) target = $region20
        $region19: #{tpu_custom_call.1} parent=15 // pred_region
          %p132 = scmp.lt.s32.totalorder %s25, 1
          %s133 = scalar_select %p132, %s25, 1
          %s134 = smul.addr %s133, 4
          %s135 = smul.addr %s134, 8
          %s136 = scalar_lea.vmem %s1, %s135
        $region20: #{tpu_custom_call.1} parent=15 // pred_fallthru
          _
        // Predicated region
        $region21: #{tpu_custom_call.1} parent=15 // pred_check
          %p137 = pneg %p76
        $region22: #{tpu_custom_call.1} parent=15 // pred_check_branch
          %139 = sbr.rel (%p137) target = $region24
        $region23: #{tpu_custom_call.1} parent=15 // pred_region
          %p140 = scmp.lt.s32.totalorder %s25, 1
          %s141 = scalar_select %p140, %s25, 1
          %s142 = smul.addr %s141, 8
          %s143 = scalar_lea.vmem %s2, %s142
        $region24: #{tpu_custom_call.1} parent=15 // pred_fallthru
          _
      $region16: #{tpu_custom_call.1} parent=5 // pred_fallthru
        _
      %p144 = scmp.le.s32.totalorder 1, %s18
      %p145 = scmp.lt.s32.totalorder %s18, 5
      %p146 = pnand %p144, %p145
      %p147 = pneg %p146
      // Predicated region
      $region25: #{tpu_custom_call.1} parent=5 // pred_check
        _
      $region26: #{tpu_custom_call.1} parent=5 // pred_check_branch
        %149 = sbr.rel (%p146) target = $region28
      $region27: #{tpu_custom_call.1} parent=5 // pred_region
        %s150 = ssub.s32 %s18, 1
        %p151 = scmp.lt.s32.totalorder %s27, 1
        %s152 = scalar_select %p151, %s27, 1
        %s153 = smul.addr %s152, 4
        %s154 = smul.addr %s153, 8
        %s155 = scalar_lea.vmem %s1, %s154
        %p156 = pneg %p56
        %p157 = pneg %p53
        %p158 = scmp.lt.s32.totalorder %s27, 1
        %s159 = scalar_select %p158, %s27, 1
        %s160 = smul.addr %s159, 8
        %s161 = scalar_lea.vmem %s2, %s160
        %p162 = pneg %p82
        %p163 = pneg %p79
        %p164 = pneg %p110
        %p165 = pneg %p107
        %s166 = sand.u32 %s97, 1
        %s167 = scalar_lea.sflag [#allocation5], %s166
        %s168 = sand.u32 %s97, 1
        %s169 = smul.addr %s168, 32
        %s170 = scalar_lea.vmem [#allocation4], %s169
        %p171 = scmp.lt.s32.totalorder %s27, 1
        %s172 = scalar_select %p171, %s27, 1
        %s173 = smul.addr %s172, 4
        %s174 = smul.addr %s173, 8
        %s175 = scalar_lea.vmem %s1, %s174
        %p176 = scmp.lt.s32.totalorder %s27, 1
        %s177 = scalar_select %p176, %s27, 1
        %s178 = smul.addr %s177, 8
        %s179 = scalar_lea.vmem %s2, %s178
        %s180 = smul.u32 %s28, 128
        %s181 = sld [smem:[#allocation3 + %s27]]
        %p182 = scmp.lt.s32.totalorder %s180, %s181
        // Predicated region
        $region29: #{tpu_custom_call.1} parent=27 // pred_check
          %p183 = pneg %p182
        $region30: #{tpu_custom_call.1} parent=27 // pred_check_branch
          %185 = sbr.rel (%p183) target = $region32
        $region31: #{tpu_custom_call.1} parent=27 // pred_region
          %v186 = vld [vmem:[%s179] sm:$0xff]
          %v187 = vstv %s180
          %v188 = vsub.s32 %v186, %v187
          %v189 = vlaneseq
          %v190 = vand.u32 %v189, 127
          %191 = vset.pattern.permute.xlu0 1
          %192 = vperm.xlu0 %191, %v188
          %v193 = vpop.permute.xlu0 %192
          %vm194 = vcmp.ge.s32.totalorder %v190, %v193
          %195 = vset.pattern.permute.xlu0 0
          %196 = vperm.xlu0 %195, %v188
          %v197 = vpop.permute.xlu0 %196
          %vm198 = vcmp.lt.s32.totalorder %v190, %v197
          %vm199 = vmand %vm194, %vm198
          %v200 = vsel %vm199, 1, 0
          %v201 = vcvt.s32.f32 %v200
          %v202 = vld [vmem:[%s175] sm:$0xff]
          %v203 = vld [vmem:[%s175 + $0x8] sm:$0xff]
          %v204 = vld [vmem:[%s175 + $0x10] sm:$0xff]
          %v205 = vld [vmem:[%s175 + $0x18] sm:$0xff]
          %vm206 = vcmask 64512
          %v208 = vsel %vm206, %v202, 0
          %v211 = vsel %vm206, %v203, 0
          %v214 = vsel %vm206, %v204, 0
          %v217 = vsel %vm206, %v205, 0
          %219 = vmatprep.subr.mxu0 0.0
          %v220 = vand.u32 %v201, 4294901760
          %221 = vmatpush1.msra.mxu0 %v220
          %222 = vmatprep.subr.mxu0 0.0
          %223 = vmatpush1.msra.mxu0 0.0
          %224 = vmatprep.subr.mxu0 0.0
          %225 = vmatpush1.msra.mxu0 0.0
          %226 = vmatprep.subr.mxu0 0.0
          %227 = vmatpush1.msra.mxu0 0.0
          %228 = vmatprep.subr.mxu0 0.0
          %229 = vmatpush1.msra.mxu0 0.0
          %230 = vmatprep.subr.mxu0 0.0
          %231 = vmatpush1.msra.mxu0 0.0
          %232 = vmatprep.subr.mxu0 0.0
          %233 = vmatpush1.msra.mxu0 0.0
          %234 = vmatprep.subr.mxu0 0.0
          %235 = vmatpush1.msra.mxu0 0.0
          %236 = vmatprep.subr.mxu0 0.0
          %237 = vmatpush1.msra.mxu0 0.0
          %238 = vmatprep.subr.mxu0 0.0
          %239 = vmatpush1.msra.mxu0 0.0
          %240 = vmatprep.subr.mxu0 0.0
          %241 = vmatpush1.msra.mxu0 0.0
          %242 = vmatprep.subr.mxu0 0.0
          %243 = vmatpush1.msra.mxu0 0.0
          %244 = vmatprep.subr.mxu0 0.0
          %245 = vmatpush1.msra.mxu0 0.0
          %246 = vmatprep.subr.mxu0 0.0
          %247 = vmatpush1.msra.mxu0 0.0
          %248 = vmatprep.subr.mxu0 0.0
          %249 = vmatpush1.msra.mxu0 0.0
          %250 = vmatprep.subr.mxu0 0.0
          %251 = vmatpush1.msra.mxu0 0.0
          %252 = vmatprep.subr.mxu0 0.0
          %253 = vmatpush1.msra.mxu0 0.0
          %254 = vmatprep.subr.mxu0 0.0
          %255 = vmatpush1.msra.mxu0 0.0
          %256 = vmatprep.subr.mxu0 0.0
          %257 = vmatpush1.msra.mxu0 0.0
          %258 = vmatprep.subr.mxu0 0.0
          %259 = vmatpush1.msra.mxu0 0.0
          %260 = vmatprep.subr.mxu0 0.0
          %261 = vmatpush1.msra.mxu0 0.0
          %262 = vmatprep.subr.mxu0 0.0
          %263 = vmatpush1.msra.mxu0 0.0
          %264 = vmatprep.subr.mxu0 0.0
          %265 = vmatpush1.msra.mxu0 0.0
          %266 = vmatprep.subr.mxu0 0.0
          %267 = vmatpush1.msra.mxu0 0.0
          %268 = vmatprep.subr.mxu0 0.0
          %269 = vmatpush1.msra.mxu0 0.0
          %270 = vmatprep.subr.mxu0 0.0
          %271 = vmatpush1.msra.mxu0 0.0
          %272 = vmatprep.subr.mxu0 0.0
          %273 = vmatpush1.msra.mxu0 0.0
          %274 = vmatprep.subr.mxu0 0.0
          %275 = vmatpush1.msra.mxu0 0.0
          %276 = vmatprep.subr.mxu0 0.0
          %277 = vmatpush1.msra.mxu0 0.0
          %278 = vmatprep.subr.mxu0 0.0
          %279 = vmatpush1.msra.mxu0 0.0
          %280 = vmatprep.subr.mxu0 0.0
          %281 = vmatpush1.msra.mxu0 0.0
          %282 = vmatprep.subr.mxu0 0.0
          %283 = vmatpush1.msra.mxu0 0.0
          %284 = vmatprep.mubr.f32.mxu0 0.0
          %v285 = vand.u32 %v208, 4294901760
          %v286 = vsub.f32 %v208, %v285
          %v287 = vand.u32 %v286, 4294901760
          %v288 = vsub.f32 %v286, %v287
          %v289 = vand.u32 %v288, 4294901760
          %290 = vmatmul.mubr.f32.gmra.mrb[0].mxu0 %v289
          %v291 = vpop.f32.mrb[0].mxu0
          %v292 = vadd.f32 0.0, %v291
          %v293 = vpop.f32.mrb[0].mxu0
          %294 = vmatprep.mubr.f32.mxu0 0.0
          %v295 = vand.u32 %v211, 4294901760
          %v296 = vsub.f32 %v211, %v295
          %v297 = vand.u32 %v296, 4294901760
          %v298 = vsub.f32 %v296, %v297
          %v299 = vand.u32 %v298, 4294901760
          %300 = vmatmul.mubr.f32.gmra.mrb[0].mxu0 %v299
          %v301 = vpop.f32.mrb[0].mxu0
          %v302 = vadd.f32 0.0, %v301
          %v303 = vpop.f32.mrb[0].mxu0
          %304 = vmatprep.mubr.f32.mxu0 0.0
          %v305 = vand.u32 %v214, 4294901760
          %v306 = vsub.f32 %v214, %v305
          %v307 = vand.u32 %v306, 4294901760
          %v308 = vsub.f32 %v306, %v307
          %v309 = vand.u32 %v308, 4294901760
          %310 = vmatmul.mubr.f32.gmra.mrb[0].mxu0 %v309
          %v311 = vpop.f32.mrb[0].mxu0
          %v312 = vadd.f32 0.0, %v311
          %v313 = vpop.f32.mrb[0].mxu0
          %314 = vmatprep.mubr.f32.mxu0 0.0
          %v315 = vand.u32 %v217, 4294901760
          %v316 = vsub.f32 %v217, %v315
          %v317 = vand.u32 %v316, 4294901760
          %v318 = vsub.f32 %v316, %v317
          %v319 = vand.u32 %v318, 4294901760
          %320 = vmatmul.mubr.f32.gmra.mrb[0].mxu0 %v319
          %v321 = vpop.f32.mrb[0].mxu0
          %v322 = vadd.f32 0.0, %v321
          %v323 = vpop.f32.mrb[0].mxu0
          %324 = vdwg.mxu0
          %325 = vmatprep.subr.mxu0 0.0
          %v326 = vand.u32 %v201, 4294901760
          %v327 = vsub.f32 %v201, %v326
          %v328 = vand.u32 %v327, 4294901760
          %v329 = vsub.f32 %v327, %v328
          %v330 = vand.u32 %v329, 4294901760
          %331 = vmatpush1.msra.mxu0 %v330
          %332 = vmatprep.subr.mxu0 0.0
          %333 = vmatpush1.msra.mxu0 0.0
          %334 = vmatprep.subr.mxu0 0.0
          %335 = vmatpush1.msra.mxu0 0.0
          %336 = vmatprep.subr.mxu0 0.0
          %337 = vmatpush1.msra.mxu0 0.0
          %338 = vmatprep.subr.mxu0 0.0
          %339 = vmatpush1.msra.mxu0 0.0
          %340 = vmatprep.subr.mxu0 0.0
          %341 = vmatpush1.msra.mxu0 0.0
          %342 = vmatprep.subr.mxu0 0.0
          %343 = vmatpush1.msra.mxu0 0.0
          %344 = vmatprep.subr.mxu0 0.0
          %345 = vmatpush1.msra.mxu0 0.0
          %346 = vmatprep.subr.mxu0 0.0
          %347 = vmatpush1.msra.mxu0 0.0
          %348 = vmatprep.subr.mxu0 0.0
          %349 = vmatpush1.msra.mxu0 0.0
          %350 = vmatprep.subr.mxu0 0.0
          %351 = vmatpush1.msra.mxu0 0.0
          %352 = vmatprep.subr.mxu0 0.0
          %353 = vmatpush1.msra.mxu0 0.0
          %354 = vmatprep.subr.mxu0 0.0
          %355 = vmatpush1.msra.mxu0 0.0
          %356 = vmatprep.subr.mxu0 0.0
          %357 = vmatpush1.msra.mxu0 0.0
          %358 = vmatprep.subr.mxu0 0.0
          %359 = vmatpush1.msra.mxu0 0.0
          %360 = vmatprep.subr.mxu0 0.0
          %361 = vmatpush1.msra.mxu0 0.0
          %362 = vmatprep.subr.mxu0 0.0
          %363 = vmatpush1.msra.mxu0 0.0
          %364 = vmatprep.subr.mxu0 0.0
          %365 = vmatpush1.msra.mxu0 0.0
          %366 = vmatprep.subr.mxu0 0.0
          %367 = vmatpush1.msra.mxu0 0.0
          %368 = vmatprep.subr.mxu0 0.0
          %369 = vmatpush1.msra.mxu0 0.0
          %370 = vmatprep.subr.mxu0 0.0
          %371 = vmatpush1.msra.mxu0 0.0
          %372 = vmatprep.subr.mxu0 0.0
          %373 = vmatpush1.msra.mxu0 0.0
          %374 = vmatprep.subr.mxu0 0.0
          %375 = vmatpush1.msra.mxu0 0.0
          %376 = vmatprep.subr.mxu0 0.0
          %377 = vmatpush1.msra.mxu0 0.0
          %378 = vmatprep.subr.mxu0 0.0
          %379 = vmatpush1.msra.mxu0 0.0
          %380 = vmatprep.subr.mxu0 0.0
          %381 = vmatpush1.msra.mxu0 0.0
          %382 = vmatprep.subr.mxu0 0.0
          %383 = vmatpush1.msra.mxu0 0.0
          %384 = vmatprep.subr.mxu0 0.0
          %385 = vmatpush1.msra.mxu0 0.0
          %386 = vmatprep.subr.mxu0 0.0
          %387 = vmatpush1.msra.mxu0 0.0
          %388 = vmatprep.subr.mxu0 0.0
          %389 = vmatpush1.msra.mxu0 0.0
          %390 = vmatprep.subr.mxu0 0.0
          %391 = vmatpush1.msra.mxu0 0.0
          %392 = vmatprep.subr.mxu0 0.0
          %393 = vmatpush1.msra.mxu0 0.0
          %394 = vmatprep.mubr.f32.mxu0 0.0
          %v395 = vand.u32 %v208, 4294901760
          %396 = vmatmul.mubr.f32.gmra.mrb[0].mxu0 %v395
          %v397 = vpop.f32.mrb[0].mxu0
          %v398 = vadd.f32 %v292, %v397
          %v399 = vpop.f32.mrb[0].mxu0
          %400 = vmatprep.mubr.f32.mxu0 0.0
          %v401 = vand.u32 %v211, 4294901760
          %402 = vmatmul.mubr.f32.gmra.mrb[0].mxu0 %v401
          %v403 = vpop.f32.mrb[0].mxu0
          %v404 = vadd.f32 %v302, %v403
          %v405 = vpop.f32.mrb[0].mxu0
          %406 = vmatprep.mubr.f32.mxu0 0.0
          %v407 = vand.u32 %v214, 4294901760
          %408 = vmatmul.mubr.f32.gmra.mrb[0].mxu0 %v407
          %v409 = vpop.f32.mrb[0].mxu0
          %v410 = vadd.f32 %v312, %v409
          %v411 = vpop.f32.mrb[0].mxu0
          %412 = vmatprep.mubr.f32.mxu0 0.0
          %v413 = vand.u32 %v217, 4294901760
          %414 = vmatmul.mubr.f32.gmra.mrb[0].mxu0 %v413
          %v415 = vpop.f32.mrb[0].mxu0
          %v416 = vadd.f32 %v322, %v415
          %v417 = vpop.f32.mrb[0].mxu0
          %418 = vdwg.mxu0
          %419 = vmatprep.subr.mxu0 0.0
          %v420 = vand.u32 %v201, 4294901760
          %v421 = vsub.f32 %v201, %v420
          %422 = vmatpush1.msra.mxu0 %v421
          %423 = vmatprep.subr.mxu0 0.0
          %424 = vmatpush1.msra.mxu0 0.0
          %425 = vmatprep.subr.mxu0 0.0
          %426 = vmatpush1.msra.mxu0 0.0
          %427 = vmatprep.subr.mxu0 0.0
          %428 = vmatpush1.msra.mxu0 0.0
          %429 = vmatprep.subr.mxu0 0.0
          %430 = vmatpush1.msra.mxu0 0.0
          %431 = vmatprep.subr.mxu0 0.0
          %432 = vmatpush1.msra.mxu0 0.0
          %433 = vmatprep.subr.mxu0 0.0
          %434 = vmatpush1.msra.mxu0 0.0
          %435 = vmatprep.subr.mxu0 0.0
          %436 = vmatpush1.msra.mxu0 0.0
          %437 = vmatprep.subr.mxu0 0.0
          %438 = vmatpush1.msra.mxu0 0.0
          %439 = vmatprep.subr.mxu0 0.0
          %440 = vmatpush1.msra.mxu0 0.0
          %441 = vmatprep.subr.mxu0 0.0
          %442 = vmatpush1.msra.mxu0 0.0
          %443 = vmatprep.subr.mxu0 0.0
          %444 = vmatpush1.msra.mxu0 0.0
          %445 = vmatprep.subr.mxu0 0.0
          %446 = vmatpush1.msra.mxu0 0.0
          %447 = vmatprep.subr.mxu0 0.0
          %448 = vmatpush1.msra.mxu0 0.0
          %449 = vmatprep.subr.mxu0 0.0
          %450 = vmatpush1.msra.mxu0 0.0
          %451 = vmatprep.subr.mxu0 0.0
          %452 = vmatpush1.msra.mxu0 0.0
          %453 = vmatprep.subr.mxu0 0.0
          %454 = vmatpush1.msra.mxu0 0.0
          %455 = vmatprep.subr.mxu0 0.0
          %456 = vmatpush1.msra.mxu0 0.0
          %457 = vmatprep.subr.mxu0 0.0
          %458 = vmatpush1.msra.mxu0 0.0
          %459 = vmatprep.subr.mxu0 0.0
          %460 = vmatpush1.msra.mxu0 0.0
          %461 = vmatprep.subr.mxu0 0.0
          %462 = vmatpush1.msra.mxu0 0.0
          %463 = vmatprep.subr.mxu0 0.0
          %464 = vmatpush1.msra.mxu0 0.0
          %465 = vmatprep.subr.mxu0 0.0
          %466 = vmatpush1.msra.mxu0 0.0
          %467 = vmatprep.subr.mxu0 0.0
          %468 = vmatpush1.msra.mxu0 0.0
          %469 = vmatprep.subr.mxu0 0.0
          %470 = vmatpush1.msra.mxu0 0.0
          %471 = vmatprep.subr.mxu0 0.0
          %472 = vmatpush1.msra.mxu0 0.0
          %473 = vmatprep.subr.mxu0 0.0
          %474 = vmatpush1.msra.mxu0 0.0
          %475 = vmatprep.subr.mxu0 0.0
          %476 = vmatpush1.msra.mxu0 0.0
          %477 = vmatprep.subr.mxu0 0.0
          %478 = vmatpush1.msra.mxu0 0.0
          %479 = vmatprep.subr.mxu0 0.0
          %480 = vmatpush1.msra.mxu0 0.0
          %481 = vmatprep.subr.mxu0 0.0
          %482 = vmatpush1.msra.mxu0 0.0
          %483 = vmatprep.subr.mxu0 0.0
          %484 = vmatpush1.msra.mxu0 0.0
          %485 = vmatprep.mubr.f32.mxu0 0.0
          %v486 = vand.u32 %v208, 4294901760
          %v487 = vsub.f32 %v208, %v486
          %488 = vmatmul.mubr.f32.gmra.mrb[0].mxu0 %v487
          %v489 = vpop.f32.mrb[0].mxu0
          %v490 = vadd.f32 %v398, %v489
          %v491 = vpop.f32.mrb[0].mxu0
          %492 = vmatprep.mubr.f32.mxu0 0.0
          %v493 = vand.u32 %v211, 4294901760
          %v494 = vsub.f32 %v211, %v493
          %495 = vmatmul.mubr.f32.gmra.mrb[0].mxu0 %v494
          %v496 = vpop.f32.mrb[0].mxu0
          %v497 = vadd.f32 %v404, %v496
          %v498 = vpop.f32.mrb[0].mxu0
          %499 = vmatprep.mubr.f32.mxu0 0.0
          %v500 = vand.u32 %v214, 4294901760
          %v501 = vsub.f32 %v214, %v500
          %502 = vmatmul.mubr.f32.gmra.mrb[0].mxu0 %v501
          %v503 = vpop.f32.mrb[0].mxu0
          %v504 = vadd.f32 %v410, %v503
          %v505 = vpop.f32.mrb[0].mxu0
          %506 = vmatprep.mubr.f32.mxu0 0.0
          %v507 = vand.u32 %v217, 4294901760
          %v508 = vsub.f32 %v217, %v507
          %509 = vmatmul.mubr.f32.gmra.mrb[0].mxu0 %v508
          %v510 = vpop.f32.mrb[0].mxu0
          %v511 = vadd.f32 %v416, %v510
          %v512 = vpop.f32.mrb[0].mxu0
          %513 = vdwg.mxu0
          %514 = vmatprep.subr.mxu0 0.0
          %v515 = vand.u32 %v201, 4294901760
          %516 = vmatpush1.msra.mxu0 %v515
          %517 = vmatprep.subr.mxu0 0.0
          %518 = vmatpush1.msra.mxu0 0.0
          %519 = vmatprep.subr.mxu0 0.0
          %520 = vmatpush1.msra.mxu0 0.0
          %521 = vmatprep.subr.mxu0 0.0
          %522 = vmatpush1.msra.mxu0 0.0
          %523 = vmatprep.subr.mxu0 0.0
          %524 = vmatpush1.msra.mxu0 0.0
          %525 = vmatprep.subr.mxu0 0.0
          %526 = vmatpush1.msra.mxu0 0.0
          %527 = vmatprep.subr.mxu0 0.0
          %528 = vmatpush1.msra.mxu0 0.0
          %529 = vmatprep.subr.mxu0 0.0
          %530 = vmatpush1.msra.mxu0 0.0
          %531 = vmatprep.subr.mxu0 0.0
          %532 = vmatpush1.msra.mxu0 0.0
          %533 = vmatprep.subr.mxu0 0.0
          %534 = vmatpush1.msra.mxu0 0.0
          %535 = vmatprep.subr.mxu0 0.0
          %536 = vmatpush1.msra.mxu0 0.0
          %537 = vmatprep.subr.mxu0 0.0
          %538 = vmatpush1.msra.mxu0 0.0
          %539 = vmatprep.subr.mxu0 0.0
          %540 = vmatpush1.msra.mxu0 0.0
          %541 = vmatprep.subr.mxu0 0.0
          %542 = vmatpush1.msra.mxu0 0.0
          %543 = vmatprep.subr.mxu0 0.0
          %544 = vmatpush1.msra.mxu0 0.0
          %545 = vmatprep.subr.mxu0 0.0
          %546 = vmatpush1.msra.mxu0 0.0
          %547 = vmatprep.subr.mxu0 0.0
          %548 = vmatpush1.msra.mxu0 0.0
          %549 = vmatprep.subr.mxu0 0.0
          %550 = vmatpush1.msra.mxu0 0.0
          %551 = vmatprep.subr.mxu0 0.0
          %552 = vmatpush1.msra.mxu0 0.0
          %553 = vmatprep.subr.mxu0 0.0
          %554 = vmatpush1.msra.mxu0 0.0
          %555 = vmatprep.subr.mxu0 0.0
          %556 = vmatpush1.msra.mxu0 0.0
          %557 = vmatprep.subr.mxu0 0.0
          %558 = vmatpush1.msra.mxu0 0.0
          %559 = vmatprep.subr.mxu0 0.0
          %560 = vmatpush1.msra.mxu0 0.0
          %561 = vmatprep.subr.mxu0 0.0
          %562 = vmatpush1.msra.mxu0 0.0
          %563 = vmatprep.subr.mxu0 0.0
          %564 = vmatpush1.msra.mxu0 0.0
          %565 = vmatprep.subr.mxu0 0.0
          %566 = vmatpush1.msra.mxu0 0.0
          %567 = vmatprep.subr.mxu0 0.0
          %568 = vmatpush1.msra.mxu0 0.0
          %569 = vmatprep.subr.mxu0 0.0
          %570 = vmatpush1.msra.mxu0 0.0
          %571 = vmatprep.subr.mxu0 0.0
          %572 = vmatpush1.msra.mxu0 0.0
          %573 = vmatprep.subr.mxu0 0.0
          %574 = vmatpush1.msra.mxu0 0.0
          %575 = vmatprep.subr.mxu0 0.0
          %576 = vmatpush1.msra.mxu0 0.0
          %577 = vmatprep.subr.mxu0 0.0
          %578 = vmatpush1.msra.mxu0 0.0
          %579 = vmatprep.mubr.f32.mxu0 0.0
          %v580 = vand.u32 %v208, 4294901760
          %v581 = vsub.f32 %v208, %v580
          %v582 = vand.u32 %v581, 4294901760
          %583 = vmatmul.mubr.f32.gmra.mrb[0].mxu0 %v582
          %v584 = vpop.f32.mrb[0].mxu0
          %v585 = vadd.f32 %v490, %v584
          %v586 = vpop.f32.mrb[0].mxu0
          %587 = vmatprep.mubr.f32.mxu0 0.0
          %v588 = vand.u32 %v211, 4294901760
          %v589 = vsub.f32 %v211, %v588
          %v590 = vand.u32 %v589, 4294901760
          %591 = vmatmul.mubr.f32.gmra.mrb[0].mxu0 %v590
          %v592 = vpop.f32.mrb[0].mxu0
          %v593 = vadd.f32 %v497, %v592
          %v594 = vpop.f32.mrb[0].mxu0
          %595 = vmatprep.mubr.f32.mxu0 0.0
          %v596 = vand.u32 %v214, 4294901760
          %v597 = vsub.f32 %v214, %v596
          %v598 = vand.u32 %v597, 4294901760
          %599 = vmatmul.mubr.f32.gmra.mrb[0].mxu0 %v598
          %v600 = vpop.f32.mrb[0].mxu0
          %v601 = vadd.f32 %v504, %v600
          %v602 = vpop.f32.mrb[0].mxu0
          %603 = vmatprep.mubr.f32.mxu0 0.0
          %v604 = vand.u32 %v217, 4294901760
          %v605 = vsub.f32 %v217, %v604
          %v606 = vand.u32 %v605, 4294901760
          %607 = vmatmul.mubr.f32.gmra.mrb[0].mxu0 %v606
          %v608 = vpop.f32.mrb[0].mxu0
          %v609 = vadd.f32 %v511, %v608
          %v610 = vpop.f32.mrb[0].mxu0
          %611 = vdwg.mxu0
          %612 = vmatprep.subr.mxu0 0.0
          %v613 = vand.u32 %v201, 4294901760
          %v614 = vsub.f32 %v201, %v613
          %v615 = vand.u32 %v614, 4294901760
          %616 = vmatpush1.msra.mxu0 %v615
          %617 = vmatprep.subr.mxu0 0.0
          %618 = vmatpush1.msra.mxu0 0.0
          %619 = vmatprep.subr.mxu0 0.0
          %620 = vmatpush1.msra.mxu0 0.0
          %621 = vmatprep.subr.mxu0 0.0
          %622 = vmatpush1.msra.mxu0 0.0
          %623 = vmatprep.subr.mxu0 0.0
          %624 = vmatpush1.msra.mxu0 0.0
          %625 = vmatprep.subr.mxu0 0.0
          %626 = vmatpush1.msra.mxu0 0.0
          %627 = vmatprep.subr.mxu0 0.0
          %628 = vmatpush1.msra.mxu0 0.0
          %629 = vmatprep.subr.mxu0 0.0
          %630 = vmatpush1.msra.mxu0 0.0
          %631 = vmatprep.subr.mxu0 0.0
          %632 = vmatpush1.msra.mxu0 0.0
          %633 = vmatprep.subr.mxu0 0.0
          %634 = vmatpush1.msra.mxu0 0.0
          %635 = vmatprep.subr.mxu0 0.0
          %636 = vmatpush1.msra.mxu0 0.0
          %637 = vmatprep.subr.mxu0 0.0
          %638 = vmatpush1.msra.mxu0 0.0
          %639 = vmatprep.subr.mxu0 0.0
          %640 = vmatpush1.msra.mxu0 0.0
          %641 = vmatprep.subr.mxu0 0.0
          %642 = vmatpush1.msra.mxu0 0.0
          %643 = vmatprep.subr.mxu0 0.0
          %644 = vmatpush1.msra.mxu0 0.0
          %645 = vmatprep.subr.mxu0 0.0
          %646 = vmatpush1.msra.mxu0 0.0
          %647 = vmatprep.subr.mxu0 0.0
          %648 = vmatpush1.msra.mxu0 0.0
          %649 = vmatprep.subr.mxu0 0.0
          %650 = vmatpush1.msra.mxu0 0.0
          %651 = vmatprep.subr.mxu0 0.0
          %652 = vmatpush1.msra.mxu0 0.0
          %653 = vmatprep.subr.mxu0 0.0
          %654 = vmatpush1.msra.mxu0 0.0
          %655 = vmatprep.subr.mxu0 0.0
          %656 = vmatpush1.msra.mxu0 0.0
          %657 = vmatprep.subr.mxu0 0.0
          %658 = vmatpush1.msra.mxu0 0.0
          %659 = vmatprep.subr.mxu0 0.0
          %660 = vmatpush1.msra.mxu0 0.0
          %661 = vmatprep.subr.mxu0 0.0
          %662 = vmatpush1.msra.mxu0 0.0
          %663 = vmatprep.subr.mxu0 0.0
          %664 = vmatpush1.msra.mxu0 0.0
          %665 = vmatprep.subr.mxu0 0.0
          %666 = vmatpush1.msra.mxu0 0.0
          %667 = vmatprep.subr.mxu0 0.0
          %668 = vmatpush1.msra.mxu0 0.0
          %669 = vmatprep.subr.mxu0 0.0
          %670 = vmatpush1.msra.mxu0 0.0
          %671 = vmatprep.subr.mxu0 0.0
          %672 = vmatpush1.msra.mxu0 0.0
          %673 = vmatprep.subr.mxu0 0.0
          %674 = vmatpush1.msra.mxu0 0.0
          %675 = vmatprep.subr.mxu0 0.0
          %676 = vmatpush1.msra.mxu0 0.0
          %677 = vmatprep.subr.mxu0 0.0
          %678 = vmatpush1.msra.mxu0 0.0
          %679 = vmatprep.mubr.f32.mxu0 0.0
          %v680 = vand.u32 %v208, 4294901760
          %681 = vmatmul.mubr.f32.gmra.mrb[0].mxu0 %v680
          %v682 = vpop.f32.mrb[0].mxu0
          %v683 = vadd.f32 %v585, %v682
          %v684 = vpop.f32.mrb[0].mxu0
          %685 = vmatprep.mubr.f32.mxu0 0.0
          %v686 = vand.u32 %v211, 4294901760
          %687 = vmatmul.mubr.f32.gmra.mrb[0].mxu0 %v686
          %v688 = vpop.f32.mrb[0].mxu0
          %v689 = vadd.f32 %v593, %v688
          %v690 = vpop.f32.mrb[0].mxu0
          %691 = vmatprep.mubr.f32.mxu0 0.0
          %v692 = vand.u32 %v214, 4294901760
          %693 = vmatmul.mubr.f32.gmra.mrb[0].mxu0 %v692
          %v694 = vpop.f32.mrb[0].mxu0
          %v695 = vadd.f32 %v601, %v694
          %v696 = vpop.f32.mrb[0].mxu0
          %697 = vmatprep.mubr.f32.mxu0 0.0
          %v698 = vand.u32 %v217, 4294901760
          %699 = vmatmul.mubr.f32.gmra.mrb[0].mxu0 %v698
          %v700 = vpop.f32.mrb[0].mxu0
          %v701 = vadd.f32 %v609, %v700
          %v702 = vpop.f32.mrb[0].mxu0
          %703 = vdwg.mxu0
          %704 = vmatprep.subr.mxu0 0.0
          %v705 = vand.u32 %v201, 4294901760
          %706 = vmatpush1.msra.mxu0 %v705
          %707 = vmatprep.subr.mxu0 0.0
          %708 = vmatpush1.msra.mxu0 0.0
          %709 = vmatprep.subr.mxu0 0.0
          %710 = vmatpush1.msra.mxu0 0.0
          %711 = vmatprep.subr.mxu0 0.0
          %712 = vmatpush1.msra.mxu0 0.0
          %713 = vmatprep.subr.mxu0 0.0
          %714 = vmatpush1.msra.mxu0 0.0
          %715 = vmatprep.subr.mxu0 0.0
          %716 = vmatpush1.msra.mxu0 0.0
          %717 = vmatprep.subr.mxu0 0.0
          %718 = vmatpush1.msra.mxu0 0.0
          %719 = vmatprep.subr.mxu0 0.0
          %720 = vmatpush1.msra.mxu0 0.0
          %721 = vmatprep.subr.mxu0 0.0
          %722 = vmatpush1.msra.mxu0 0.0
          %723 = vmatprep.subr.mxu0 0.0
          %724 = vmatpush1.msra.mxu0 0.0
          %725 = vmatprep.subr.mxu0 0.0
          %726 = vmatpush1.msra.mxu0 0.0
          %727 = vmatprep.subr.mxu0 0.0
          %728 = vmatpush1.msra.mxu0 0.0
          %729 = vmatprep.subr.mxu0 0.0
          %730 = vmatpush1.msra.mxu0 0.0
          %731 = vmatprep.subr.mxu0 0.0
          %732 = vmatpush1.msra.mxu0 0.0
          %733 = vmatprep.subr.mxu0 0.0
          %734 = vmatpush1.msra.mxu0 0.0
          %735 = vmatprep.subr.mxu0 0.0
          %736 = vmatpush1.msra.mxu0 0.0
          %737 = vmatprep.subr.mxu0 0.0
          %738 = vmatpush1.msra.mxu0 0.0
          %739 = vmatprep.subr.mxu0 0.0
          %740 = vmatpush1.msra.mxu0 0.0
          %741 = vmatprep.subr.mxu0 0.0
          %742 = vmatpush1.msra.mxu0 0.0
          %743 = vmatprep.subr.mxu0 0.0
          %744 = vmatpush1.msra.mxu0 0.0
          %745 = vmatprep.subr.mxu0 0.0
          %746 = vmatpush1.msra.mxu0 0.0
          %747 = vmatprep.subr.mxu0 0.0
          %748 = vmatpush1.msra.mxu0 0.0
          %749 = vmatprep.subr.mxu0 0.0
          %750 = vmatpush1.msra.mxu0 0.0
          %751 = vmatprep.subr.mxu0 0.0
          %752 = vmatpush1.msra.mxu0 0.0
          %753 = vmatprep.subr.mxu0 0.0
          %754 = vmatpush1.msra.mxu0 0.0
          %755 = vmatprep.subr.mxu0 0.0
          %756 = vmatpush1.msra.mxu0 0.0
          %757 = vmatprep.subr.mxu0 0.0
          %758 = vmatpush1.msra.mxu0 0.0
          %759 = vmatprep.subr.mxu0 0.0
          %760 = vmatpush1.msra.mxu0 0.0
          %761 = vmatprep.subr.mxu0 0.0
          %762 = vmatpush1.msra.mxu0 0.0
          %763 = vmatprep.subr.mxu0 0.0
          %764 = vmatpush1.msra.mxu0 0.0
          %765 = vmatprep.subr.mxu0 0.0
          %766 = vmatpush1.msra.mxu0 0.0
          %767 = vmatprep.subr.mxu0 0.0
          %768 = vmatpush1.msra.mxu0 0.0
          %769 = vmatprep.mubr.f32.mxu0 0.0
          %v770 = vand.u32 %v208, 4294901760
          %771 = vmatmul.mubr.f32.gmra.mrb[0].mxu0 %v770
          %v772 = vpop.f32.mrb[0].mxu0
          %v773 = vadd.f32 %v683, %v772
          %v774 = vpop.f32.mrb[0].mxu0
          %775 = vmatprep.mubr.f32.mxu0 0.0
          %v776 = vand.u32 %v211, 4294901760
          %777 = vmatmul.mubr.f32.gmra.mrb[0].mxu0 %v776
          %v778 = vpop.f32.mrb[0].mxu0
          %v779 = vadd.f32 %v689, %v778
          %v780 = vpop.f32.mrb[0].mxu0
          %781 = vmatprep.mubr.f32.mxu0 0.0
          %v782 = vand.u32 %v214, 4294901760
          %783 = vmatmul.mubr.f32.gmra.mrb[0].mxu0 %v782
          %v784 = vpop.f32.mrb[0].mxu0
          %v785 = vadd.f32 %v695, %v784
          %v786 = vpop.f32.mrb[0].mxu0
          %787 = vmatprep.mubr.f32.mxu0 0.0
          %v788 = vand.u32 %v217, 4294901760
          %789 = vmatmul.mubr.f32.gmra.mrb[0].mxu0 %v788
          %v790 = vpop.f32.mrb[0].mxu0
          %v791 = vadd.f32 %v701, %v790
          %v792 = vpop.f32.mrb[0].mxu0
          %793 = vdwg.mxu0
          %794 = vst [vmem:[%s170] sm:$0xff] %v773
          %795 = vst [vmem:[%s170 + $0x8] sm:$0xff] %v779
          %796 = vst [vmem:[%s170 + $0x10] sm:$0xff] %v785
          %797 = vst [vmem:[%s170 + $0x18] sm:$0xff] %v791
        $region32: #{tpu_custom_call.1} parent=27 // pred_fallthru
          _
        %p798 = scmp.ge.s32.totalorder %s180, %s181
        // Predicated region
        $region33: #{tpu_custom_call.1} parent=27 // pred_check
          %p799 = pneg %p798
        $region34: #{tpu_custom_call.1} parent=27 // pred_check_branch
          %801 = sbr.rel (%p799) target = $region36
        $region35: #{tpu_custom_call.1} parent=27 // pred_region
          %802 = vst [vmem:[%s170] sm:$0xff] 0.0
          %803 = vst [vmem:[%s170 + $0x8] sm:$0xff] 0.0
          %804 = vst [vmem:[%s170 + $0x10] sm:$0xff] 0.0
          %805 = vst [vmem:[%s170 + $0x18] sm:$0xff] 0.0
        $region36: #{tpu_custom_call.1} parent=27 // pred_fallthru
          _
        %s806 = sand.u32 %s97, 1
        %s807 = scalar_lea.sflag [#allocation5], %s806
        %s808 = sand.u32 %s97, 1
        %s809 = smul.addr %s808, 32
        %s810 = scalar_lea.vmem [#allocation4], %s809
        // Predicated region
        $region37: #{tpu_custom_call.1} parent=27 // pred_check
          %p811 = pneg %p107
        $region38: #{tpu_custom_call.1} parent=27 // pred_check_branch
          %813 = sbr.rel (%p811) target = $region40
        $region39: #{tpu_custom_call.1} parent=27 // pred_region
          %s815 = ssub.s32 512, 512
          %816 = vsyncadd %s807, %s815
          %s817 = smul.addr %s27, 8
          %s818 = sadd.s32 %s28, %s817
          %s819 = smul.addr %s818, 128
          %s820 = scalar_lea.hbm %s3, %s819
          %s821 = sshll.u32 %s810, 4
          %s822 = int_to_ptr.vmem [resolvable:$true] %s821
          %827 = dma.vmem_to_hbm [thread:$0]  %s822, 512, %s820, %s807, 128, 256, 8
        $region40: #{tpu_custom_call.1} parent=27 // pred_fallthru
          _
      $region28: #{tpu_custom_call.1} parent=5 // pred_fallthru
        _
      %p828 = scmp.le.s32.totalorder 2, %s18
      // Predicated region
      $region41: #{tpu_custom_call.1} parent=5 // pred_check
        %p829 = pneg %p828
      $region42: #{tpu_custom_call.1} parent=5 // pred_check_branch
        %831 = sbr.rel (%p829) target = $region44
      $region43: #{tpu_custom_call.1} parent=5 // pred_region
        %s832 = ssub.s32 %s18, 2
        // Predicated region
        $region45: #{tpu_custom_call.1} parent=43 // pred_check
          %p833 = pneg %p113
        $region46: #{tpu_custom_call.1} parent=43 // pred_check_branch
          %835 = sbr.rel (%p833) target = $region48
        $region47: #{tpu_custom_call.1} parent=43 // pred_region
          %s836 = sand.u32 %s98, 1
          %s837 = scalar_lea.sflag [#allocation5], %s836
          %s838 = sand.u32 %s98, 1
          %s839 = smul.addr %s838, 32
          %s840 = scalar_lea.vmem [#allocation4], %s839
          %841 = dma.done %s837, 512
        $region48: #{tpu_custom_call.1} parent=43 // pred_fallthru
          _
      $region44: #{tpu_custom_call.1} parent=5 // pred_fallthru
        _
    $region6: #{tpu_custom_call.1} parent=1 // loop_footer
      %s22 = sadd.s32 1, %s18
    $region7: #{tpu_custom_call.1} parent=1 // loop_footer_branch
      %17 = sbr.rel target = $region3
    $region8: #{tpu_custom_call.1} parent=1 // loop_exit
      _
    %842 = vsyncpa [#allocation5], 1
    %s843 = scalar_lea.sflag [#allocation5], 1
    %844 = vsyncpa %s843, 1

</llo_original>
